<compile_context>
chip_gen: v7x
topology: tpu7x:2x2x1
jax: 0.10.0
libtpu: 0.0.40
codegen_flags: <defaults>
</compile_context>

<pallas_src>
import functools

import jax
import jax.numpy as jnp
from jax import lax
from jax.experimental import pallas as pl
from jax.experimental.pallas import tpu as pltpu


# --------------------------------------------------------------------------
# Kernel
# --------------------------------------------------------------------------
def _gem_kernel(x_ref, pc_ref, o_ref, *, eps, normalize):
    # x_ref : (t, P, Wp, P, C)   input block (rows x H-window x Wp x W-window x C)
    # pc_ref: (3, C)             [p ; 1/p ; (1/(P*P))**(1/p)]
    # o_ref : (t, Wp, C)         pooled output block
    p = pc_ref[0]          # (C,) broadcasts over the lane dim
    inv_p = pc_ref[1]      # (C,) precomputed 1/p
    area_pow = pc_ref[2]   # (C,) precomputed (1/(P*P))**(1/p)

    t, ph, wp, pw, c = x_ref.shape

    # Stream over the H-window axis: one (t, Wp, P, C) slice per iteration.
    # clamp(min=eps) ** p is 2 transcendentals/element on the EUP (the compute
    # floor); accumulation is plain VPU adds.
    def body(h, acc):
        xs = x_ref[:, h].astype(jnp.float32)                 # (t, Wp, P, C)
        return acc + jnp.power(jnp.maximum(xs, eps), p)

    acc = lax.fori_loop(0, ph, body,
                        jnp.zeros((t, wp, pw, c), jnp.float32),
                        unroll=True)

    # W-window reduce: one sublane (XLU) reduce on the P-times-smaller tensor.
    pooled_sum = jnp.sum(acc, axis=2)                         # (t, Wp, C)

    # (** 1/p) then fold in the 1/(P*P) window mean as a single multiply.
    out = jnp.power(pooled_sum, inv_p) * area_pow             # (t, Wp, C)

    if normalize:
        # F.normalize(dim=-1, p=2, eps=1e-12) == x * rsqrt(max(sum(x^2), 1e-24))
        ss = jnp.sum(out * out, axis=-1, keepdims=True)
        out = out * lax.rsqrt(jnp.maximum(ss, 1e-24))

    o_ref[...] = out.astype(o_ref.dtype)


# --------------------------------------------------------------------------
# VMEM footprint model & tile picking
# --------------------------------------------------------------------------
def _sublane_multiple(itemsize):
    # (8,128) tiling for 32-bit; packed dtypes tile (16,128) / (32,128).
    return max(8, 32 // max(1, int(itemsize)))


def _padded_bytes(shape, dtype):
    """VMEM footprint of a block, accounting for dtype-aware (sublane, 128) tiling."""
    dt = jnp.dtype(dtype)
    s = list(shape)
    s[-1] = -(-s[-1] // 128) * 128
    if len(s) >= 2:
        m = _sublane_multiple(dt.itemsize)
        s[-2] = -(-s[-2] // m) * m
    n = 1
    for d in s:
        n *= d
    return n * dt.itemsize


def _per_row_bytes(P, Wp, C, in_dtype, out_dtype):
    """Per-output-row VMEM cost: double-buffered I/O + streamed f32 intermediates."""
    in_row = 2 * _padded_bytes((P, Wp, P, C), in_dtype)        # double-buffered input
    out_row = 2 * _padded_bytes((Wp, C), out_dtype)            # double-buffered output
    # streamed f32 slice + its pow + the f32 accumulator (~3 slice-equivalents)
    inter_row = 3 * _padded_bytes((Wp, P, C), jnp.float32)
    return in_row + out_row + inter_row


def _fixed_bytes(C):
    return 2 * _padded_bytes((3, C), jnp.float32)              # resident pc block


def _pick_row_tile(R, P, Wp, C, in_dtype, out_dtype, budget_bytes):
    row = _per_row_bytes(P, Wp, C, in_dtype, out_dtype)
    avail = max(0, budget_bytes - _fixed_bytes(C))
    # Largest tile fitting the budget; fall back to t=1 if even that is over
    # (vmem_limit_bytes below is derived from the real footprint, so it still
    # compiles as long as it physically fits).
    t = max(1, min(R, avail // row))
    # Keep >= ~8 grid steps when R allows: restores per-core double-buffering
    # and balances the 2-TensorCore split on v7x that ("parallel",) enables.
    if R >= 16:
        t = min(t, max(1, R // 8))
    return int(t)


def _vmem_capacity_bytes():
    try:
        info = pltpu.get_tpu_info()
        cap = getattr(info, "vmem_capacity_bytes", None)
        if cap:
            return int(cap)
    except Exception:
        pass
    return 64 * 1024 * 1024  # conservative fallback (v7x per-TensorCore)


# --------------------------------------------------------------------------
# Wrapper
# --------------------------------------------------------------------------
def gem_pooling(x, p, pool_size, *, eps=1e-6, normalize=False,
                vmem_budget_bytes=None):
    """x: (N, H, W, C) NHWC, p: (C,).  Returns (N, H//P, W//P, C)."""
    N, H, W, C = x.shape
    P = int(pool_size)
    assert H % P == 0 and W % P == 0, "spatial dims must be divisible by pool_size"
    Hp, Wp = H // P, W // P
    R = N * Hp  # independent output rows

    # Pure-layout glue (free view split): fold (N, Hp) into one row axis.
    x_r = x.reshape(R, P, Wp, P, C)

    # Precompute p, 1/p and (1/(P*P))**(1/p) once; ship as one tiny (3, C) block.
    p32 = p.astype(jnp.float32)
    inv_p = 1.0 / p32
    area_pow = jnp.power(jnp.float32(1.0 / (P * P)), inv_p)
    pc = jnp.stack([p32, inv_p, area_pow], axis=0)             # (3, C)

    in_dt = jnp.dtype(x.dtype)
    out_dt = in_dt

    capacity = _vmem_capacity_bytes()
    if vmem_budget_bytes is None:
        # ~half of physical VMEM for the tiled working set:
        # 64 MiB on 128 MiB parts (v5e/v6e), 32 MiB on 64 MiB parts (v7x).
        vmem_budget_bytes = max(16 << 20, min(capacity // 2, 64 << 20))

    t = _pick_row_tile(R, P, Wp, C, in_dt, out_dt, vmem_budget_bytes)
    steps = pl.cdiv(R, t)

    # Derive the compiler VMEM limit from the *actual* chosen footprint
    # (with margin for compiler scratch), capped by physical capacity.
    footprint = t * _per_row_bytes(P, Wp, C, in_dt, out_dt) + _fixed_bytes(C)
    vmem_limit = int(min(int(0.9 * capacity),
                         max(32 << 20, int(footprint * 1.5) + (8 << 20))))

    kernel = functools.partial(_gem_kernel, eps=float(eps), normalize=bool(normalize))

    out = pl.pallas_call(
        kernel,
        out_shape=jax.ShapeDtypeStruct((R, Wp, C), x.dtype),
        grid_spec=pltpu.PrefetchScalarGridSpec(
            num_scalar_prefetch=0,
            grid=(steps,),
            in_specs=[
                pl.BlockSpec((t, P, Wp, P, C), lambda i: (i, 0, 0, 0, 0)),
                pl.BlockSpec((3, C), lambda i: (0, 0)),        # resident constants
            ],
            out_specs=pl.BlockSpec((t, Wp, C), lambda i: (i, 0, 0)),
        ),
        compiler_params=pltpu.CompilerParams(
            dimension_semantics=("parallel",),
            vmem_limit_bytes=vmem_limit,
        ),
    )(x_r, pc)

    return out.reshape(N, Hp, Wp, C)


# --------------------------------------------------------------------------
# Plain-JAX reference mirroring the PyTorch forward
# --------------------------------------------------------------------------
def gem_pooling_ref(x, p, pool_size, *, eps=1e-6, normalize=False):
    N, H, W, C = x.shape
    P = pool_size
    xp = jnp.power(jnp.maximum(x.astype(jnp.float32), eps), p)
    pooled = xp.reshape(N, H // P, P, W // P, P, C).mean(axis=(2, 4))
    out = jnp.power(pooled, 1.0 / p)
    if normalize:
        nrm = jnp.sqrt(jnp.sum(out * out, axis=-1, keepdims=True))
        out = out / jnp.maximum(nrm, 1e-12)
    return out.astype(x.dtype)


# --------------------------------------------------------------------------
# Self-test
# --------------------------------------------------------------------------
if __name__ == "__main__":
    INIT_NORM = 3.0
    EPS = 1e-6
    key = jax.random.PRNGKey(0)

    def run_case(key, N, H, W, C, pool, normalize):
        kx, key = jax.random.split(key)
        x = jax.random.uniform(kx, (N, H, W, C), dtype=jnp.float32,
                               minval=0.0, maxval=2.0)
        # Deterministic parameter init, as in the module's __init__:
        # self.p = Parameter(ones(feature_size) * init_norm)
        p = jnp.full((C,), INIT_NORM, dtype=jnp.float32)

        out = gem_pooling(x, p, pool, eps=EPS, normalize=normalize)
        out = jax.block_until_ready(out)
        ref = gem_pooling_ref(x, p, pool, eps=EPS, normalize=normalize)
        assert out.shape == (N, H // pool, W // pool, C), out.shape
        assert jnp.allclose(out, ref, rtol=1e-5, atol=1e-5), (
            f"mismatch N={N} H={H} W={W} C={C} pool={pool} normalize={normalize}")
        return key

    # Small case (pooled spatial 2x2, batch 2: torch.squeeze is a no-op),
    # both normalize paths.  C=128 keeps the lane dimension dense.
    key = run_case(key, 2, 16, 16, 128, 8, False)
    key = run_case(key, 2, 16, 16, 128, 8, True)

    # Larger row count: R = N*Hp = 26 -> 9 grid steps with a partial last
    # block, exercising the cdiv grid + pipelined path.
    key = run_case(key, 2, 104, 16, 128, 8, True)

    print("KERNEL_OK")
</pallas_src>

<mosaic_0001>
module attributes {stable_mosaic.version = 11 : i64} {
  func.func @_gem_kernel(%arg0: i32, %arg1: memref<4x8x2x8x128xf32, #tpu.memory_space<vmem>>, %arg2: memref<3x128xf32, #tpu.memory_space<vmem>>, %arg3: memref<4x2x128xf32, #tpu.memory_space<vmem>>) attributes {dimension_semantics = [#tpu.dimension_semantics<parallel>], iteration_bounds = array<i64: 1>, scalar_prefetch = 0 : i64, scratch_operands = 0 : i64, tpu.core_type = #tpu.core_type<tc>, window_params = [{transform_indices = @transform_0, window_bounds = array<i64: 4, 8, 2, 8, 128>}, {pipeline_mode = #tpu.pipeline_mode<synchronous>, transform_indices = @transform_1, window_bounds = array<i64: 3, 128>}, {transform_indices = @transform_2, window_bounds = array<i64: 4, 2, 128>}]} {
    %c0 = arith.constant 0 : index
    %c0_0 = arith.constant 0 : index
    %0 = vector.load %arg2[%c0, %c0_0] : memref<3x128xf32, #tpu.memory_space<vmem>>, vector<1x128xf32>
    %1 = vector.shape_cast %0 : vector<1x128xf32> to vector<128xf32>
    %c1 = arith.constant 1 : index
    %c0_1 = arith.constant 0 : index
    %2 = vector.load %arg2[%c1, %c0_1] : memref<3x128xf32, #tpu.memory_space<vmem>>, vector<1x128xf32>
    %3 = vector.shape_cast %2 : vector<1x128xf32> to vector<128xf32>
    %c2 = arith.constant 2 : index
    %c0_2 = arith.constant 0 : index
    %4 = vector.load %arg2[%c2, %c0_2] : memref<3x128xf32, #tpu.memory_space<vmem>>, vector<1x128xf32>
    %5 = vector.shape_cast %4 : vector<1x128xf32> to vector<128xf32>
    %cst = arith.constant 0.000000e+00 : f32
    %6 = vector.broadcast %cst : f32 to vector<4x2x8x128xf32>
    %c0_i32 = arith.constant 0 : i32
    %c0_3 = arith.constant 0 : index
    %7 = arith.index_cast %c0_i32 : i32 to index
    %c0_4 = arith.constant 0 : index
    %c0_5 = arith.constant 0 : index
    %c0_6 = arith.constant 0 : index
    %8 = vector.load %arg1[%c0_3, %7, %c0_4, %c0_5, %c0_6] : memref<4x8x2x8x128xf32, #tpu.memory_space<vmem>>, vector<4x1x2x8x128xf32>
    %9 = vector.shape_cast %8 : vector<4x1x2x8x128xf32> to vector<4x2x8x128xf32>
    %cst_7 = arith.constant 9.99999997E-7 : f32
    %10 = vector.broadcast %cst_7 : f32 to vector<4x2x8x128xf32>
    %11 = arith.maximumf %9, %10 : vector<4x2x8x128xf32>
    %12 = vector.shape_cast %1 : vector<128xf32> to vector<1x1x1x128xf32>
    %13 = vector.broadcast %12 : vector<1x1x1x128xf32> to vector<4x2x8x128xf32>
    %14 = math.powf %11, %13 : vector<4x2x8x128xf32>
    %15 = arith.addf %6, %14 : vector<4x2x8x128xf32>
    %c1_i32 = arith.constant 1 : i32
    %c0_8 = arith.constant 0 : index
    %16 = arith.index_cast %c1_i32 : i32 to index
    %c0_9 = arith.constant 0 : index
    %c0_10 = arith.constant 0 : index
    %c0_11 = arith.constant 0 : index
    %17 = vector.load %arg1[%c0_8, %16, %c0_9, %c0_10, %c0_11] : memref<4x8x2x8x128xf32, #tpu.memory_space<vmem>>, vector<4x1x2x8x128xf32>
    %18 = vector.shape_cast %17 : vector<4x1x2x8x128xf32> to vector<4x2x8x128xf32>
    %cst_12 = arith.constant 9.99999997E-7 : f32
    %19 = vector.broadcast %cst_12 : f32 to vector<4x2x8x128xf32>
    %20 = arith.maximumf %18, %19 : vector<4x2x8x128xf32>
    %21 = vector.shape_cast %1 : vector<128xf32> to vector<1x1x1x128xf32>
    %22 = vector.broadcast %21 : vector<1x1x1x128xf32> to vector<4x2x8x128xf32>
    %23 = math.powf %20, %22 : vector<4x2x8x128xf32>
    %24 = arith.addf %15, %23 : vector<4x2x8x128xf32>
    %c2_i32 = arith.constant 2 : i32
    %c0_13 = arith.constant 0 : index
    %25 = arith.index_cast %c2_i32 : i32 to index
    %c0_14 = arith.constant 0 : index
    %c0_15 = arith.constant 0 : index
    %c0_16 = arith.constant 0 : index
    %26 = vector.load %arg1[%c0_13, %25, %c0_14, %c0_15, %c0_16] : memref<4x8x2x8x128xf32, #tpu.memory_space<vmem>>, vector<4x1x2x8x128xf32>
    %27 = vector.shape_cast %26 : vector<4x1x2x8x128xf32> to vector<4x2x8x128xf32>
    %cst_17 = arith.constant 9.99999997E-7 : f32
    %28 = vector.broadcast %cst_17 : f32 to vector<4x2x8x128xf32>
    %29 = arith.maximumf %27, %28 : vector<4x2x8x128xf32>
    %30 = vector.shape_cast %1 : vector<128xf32> to vector<1x1x1x128xf32>
    %31 = vector.broadcast %30 : vector<1x1x1x128xf32> to vector<4x2x8x128xf32>
    %32 = math.powf %29, %31 : vector<4x2x8x128xf32>
    %33 = arith.addf %24, %32 : vector<4x2x8x128xf32>
    %c3_i32 = arith.constant 3 : i32
    %c0_18 = arith.constant 0 : index
    %34 = arith.index_cast %c3_i32 : i32 to index
    %c0_19 = arith.constant 0 : index
    %c0_20 = arith.constant 0 : index
    %c0_21 = arith.constant 0 : index
    %35 = vector.load %arg1[%c0_18, %34, %c0_19, %c0_20, %c0_21] : memref<4x8x2x8x128xf32, #tpu.memory_space<vmem>>, vector<4x1x2x8x128xf32>
    %36 = vector.shape_cast %35 : vector<4x1x2x8x128xf32> to vector<4x2x8x128xf32>
    %cst_22 = arith.constant 9.99999997E-7 : f32
    %37 = vector.broadcast %cst_22 : f32 to vector<4x2x8x128xf32>
    %38 = arith.maximumf %36, %37 : vector<4x2x8x128xf32>
    %39 = vector.shape_cast %1 : vector<128xf32> to vector<1x1x1x128xf32>
    %40 = vector.broadcast %39 : vector<1x1x1x128xf32> to vector<4x2x8x128xf32>
    %41 = math.powf %38, %40 : vector<4x2x8x128xf32>
    %42 = arith.addf %33, %41 : vector<4x2x8x128xf32>
    %c4_i32 = arith.constant 4 : i32
    %c0_23 = arith.constant 0 : index
    %43 = arith.index_cast %c4_i32 : i32 to index
    %c0_24 = arith.constant 0 : index
    %c0_25 = arith.constant 0 : index
    %c0_26 = arith.constant 0 : index
    %44 = vector.load %arg1[%c0_23, %43, %c0_24, %c0_25, %c0_26] : memref<4x8x2x8x128xf32, #tpu.memory_space<vmem>>, vector<4x1x2x8x128xf32>
    %45 = vector.shape_cast %44 : vector<4x1x2x8x128xf32> to vector<4x2x8x128xf32>
    %cst_27 = arith.constant 9.99999997E-7 : f32
    %46 = vector.broadcast %cst_27 : f32 to vector<4x2x8x128xf32>
    %47 = arith.maximumf %45, %46 : vector<4x2x8x128xf32>
    %48 = vector.shape_cast %1 : vector<128xf32> to vector<1x1x1x128xf32>
    %49 = vector.broadcast %48 : vector<1x1x1x128xf32> to vector<4x2x8x128xf32>
    %50 = math.powf %47, %49 : vector<4x2x8x128xf32>
    %51 = arith.addf %42, %50 : vector<4x2x8x128xf32>
    %c5_i32 = arith.constant 5 : i32
    %c0_28 = arith.constant 0 : index
    %52 = arith.index_cast %c5_i32 : i32 to index
    %c0_29 = arith.constant 0 : index
    %c0_30 = arith.constant 0 : index
    %c0_31 = arith.constant 0 : index
    %53 = vector.load %arg1[%c0_28, %52, %c0_29, %c0_30, %c0_31] : memref<4x8x2x8x128xf32, #tpu.memory_space<vmem>>, vector<4x1x2x8x128xf32>
    %54 = vector.shape_cast %53 : vector<4x1x2x8x128xf32> to vector<4x2x8x128xf32>
    %cst_32 = arith.constant 9.99999997E-7 : f32
    %55 = vector.broadcast %cst_32 : f32 to vector<4x2x8x128xf32>
    %56 = arith.maximumf %54, %55 : vector<4x2x8x128xf32>
    %57 = vector.shape_cast %1 : vector<128xf32> to vector<1x1x1x128xf32>
    %58 = vector.broadcast %57 : vector<1x1x1x128xf32> to vector<4x2x8x128xf32>
    %59 = math.powf %56, %58 : vector<4x2x8x128xf32>
    %60 = arith.addf %51, %59 : vector<4x2x8x128xf32>
    %c6_i32 = arith.constant 6 : i32
    %c0_33 = arith.constant 0 : index
    %61 = arith.index_cast %c6_i32 : i32 to index
    %c0_34 = arith.constant 0 : index
    %c0_35 = arith.constant 0 : index
    %c0_36 = arith.constant 0 : index
    %62 = vector.load %arg1[%c0_33, %61, %c0_34, %c0_35, %c0_36] : memref<4x8x2x8x128xf32, #tpu.memory_space<vmem>>, vector<4x1x2x8x128xf32>
    %63 = vector.shape_cast %62 : vector<4x1x2x8x128xf32> to vector<4x2x8x128xf32>
    %cst_37 = arith.constant 9.99999997E-7 : f32
    %64 = vector.broadcast %cst_37 : f32 to vector<4x2x8x128xf32>
    %65 = arith.maximumf %63, %64 : vector<4x2x8x128xf32>
    %66 = vector.shape_cast %1 : vector<128xf32> to vector<1x1x1x128xf32>
    %67 = vector.broadcast %66 : vector<1x1x1x128xf32> to vector<4x2x8x128xf32>
    %68 = math.powf %65, %67 : vector<4x2x8x128xf32>
    %69 = arith.addf %60, %68 : vector<4x2x8x128xf32>
    %c7_i32 = arith.constant 7 : i32
    %c0_38 = arith.constant 0 : index
    %70 = arith.index_cast %c7_i32 : i32 to index
    %c0_39 = arith.constant 0 : index
    %c0_40 = arith.constant 0 : index
    %c0_41 = arith.constant 0 : index
    %71 = vector.load %arg1[%c0_38, %70, %c0_39, %c0_40, %c0_41] : memref<4x8x2x8x128xf32, #tpu.memory_space<vmem>>, vector<4x1x2x8x128xf32>
    %72 = vector.shape_cast %71 : vector<4x1x2x8x128xf32> to vector<4x2x8x128xf32>
    %cst_42 = arith.constant 9.99999997E-7 : f32
    %73 = vector.broadcast %cst_42 : f32 to vector<4x2x8x128xf32>
    %74 = arith.maximumf %72, %73 : vector<4x2x8x128xf32>
    %75 = vector.shape_cast %1 : vector<128xf32> to vector<1x1x1x128xf32>
    %76 = vector.broadcast %75 : vector<1x1x1x128xf32> to vector<4x2x8x128xf32>
    %77 = math.powf %74, %76 : vector<4x2x8x128xf32>
    %78 = arith.addf %69, %77 : vector<4x2x8x128xf32>
    %c8_i32 = arith.constant 8 : i32
    %cst_43 = arith.constant dense<0.000000e+00> : vector<4x2x128xf32>
    %79 = vector.multi_reduction <add>, %78, %cst_43 [2] : vector<4x2x8x128xf32> to vector<4x2x128xf32>
    %80 = vector.shape_cast %3 : vector<128xf32> to vector<1x1x128xf32>
    %81 = vector.broadcast %80 : vector<1x1x128xf32> to vector<4x2x128xf32>
    %82 = math.powf %79, %81 : vector<4x2x128xf32>
    %83 = vector.shape_cast %5 : vector<128xf32> to vector<1x1x128xf32>
    %84 = vector.broadcast %83 : vector<1x1x128xf32> to vector<4x2x128xf32>
    %85 = arith.mulf %82, %84 : vector<4x2x128xf32>
    %c0_44 = arith.constant 0 : index
    %c0_45 = arith.constant 0 : index
    %c0_46 = arith.constant 0 : index
    %86 = vector.load %arg3[%c0_44, %c0_45, %c0_46] : memref<4x2x128xf32, #tpu.memory_space<vmem>>, vector<4x2x128xf32>
    tpu.vector_store %arg3[%c0_44, %c0_45, %c0_46], %85 {strides = array<i32>} : memref<4x2x128xf32, #tpu.memory_space<vmem>>, vector<4x2x128xf32>,
    return
  }
  func.func @transform_0(%arg0: i32) -> (i32, i32, i32, i32, i32) {
    %c0_i32 = arith.constant 0 : i32
    %c0_i32_0 = arith.constant 0 : i32
    %c0_i32_1 = arith.constant 0 : i32
    %c0_i32_2 = arith.constant 0 : i32
    %c0_i32_3 = arith.constant 0 : i32
    return %arg0, %c0_i32, %c0_i32_0, %c0_i32_1, %c0_i32_2 : i32, i32, i32, i32, i32
  }
  func.func @transform_1(%arg0: i32) -> (i32, i32) {
    %c0_i32 = arith.constant 0 : i32
    %c0_i32_0 = arith.constant 0 : i32
    %c0_i32_1 = arith.constant 0 : i32
    return %c0_i32, %c0_i32_0 : i32, i32
  }
  func.func @transform_2(%arg0: i32) -> (i32, i32, i32) {
    %c0_i32 = arith.constant 0 : i32
    %c0_i32_0 = arith.constant 0 : i32
    %c0_i32_1 = arith.constant 0 : i32
    return %arg0, %c0_i32, %c0_i32_0 : i32, i32, i32
  }
}

</mosaic_0001>

<llo_original>
// kernel: tpu_custom_call.1
$region0: #{tpu_custom_call.1}
  #allocation0 [shape = 'u32[]', space=smem, size = 0x4, offset = 0x4, fixed_abs, tag = 'smem constant byte address 0x4 - core index']
  #allocation1 [shape = 'u32[144,128]{1,0:T(1,128)}', space=vmem, size = 0x12000, scoped, tag = 'internal scratch']
  %s0 = inlined_call_operand.hbm [shape: f32[4,8,2,8,128], index: 0, kind: input, shape index: {}]
  %s1 = inlined_call_operand.hbm [shape: f32[3,128], index: 1, kind: input, shape index: {}]
  %s2 = inlined_call_operand.hbm [shape: f32[4,2,128], index: 2, kind: output, shape index: {}]
  %s3 = sld [smem:[#allocation0]]
  $region26: #{tpu_custom_call.1} parent=0
    _
  %s5 = ssub.s32 1, %s3
  %s6 = scalar_select 0, %s5, %s3
  $region1: #{tpu_custom_call.1} parent=0
    #allocation2 [shape = 'u8[262144]{0}', space=vmem, size = 0x40000, scoped, tag = 'input window, operand 0, single buffered']
    #allocation3 [shape = 's32[1]{0}', space=sflag, size = 0x4, scoped, tag = 'scoped memory for tpu_custom_call.1']
    #allocation4 [shape = 's32[1]{0}', space=sflag, size = 0x4, scoped, tag = 'scoped memory for tpu_custom_call.1']
    #allocation5 [shape = 'u8[2048]{0}', space=vmem, size = 0x800, scoped, tag = 'input window, operand 1, single buffered']
    #allocation6 [shape = 's32[1]{0}', space=sflag, size = 0x4, scoped, tag = 'scoped memory for tpu_custom_call.1']
    #allocation7 [shape = 'u8[4096]{0}', space=vmem, size = 0x1000, scoped, tag = 'output window, operand 0, single buffered']
    %7 = vsyncpa [#allocation3], 0
    %8 = vsyncpa [#allocation6], 0
    %9 = vsyncpa [#allocation4], 0
    // Predicated region
    $region2: #{tpu_custom_call.1} parent=1 // pred_check
      _
    $region3: #{tpu_custom_call.1} parent=1 // pred_check_branch
      %11 = sbr.rel (0) target = $region5
    $region4: #{tpu_custom_call.1} parent=1 // pred_region
      %s13 = ssub.s32 8192, 8192
      %14 = vsyncadd [#allocation3], %s13
      %s15 = sshll.u32 [#allocation2], 4
      %s16 = int_to_ptr.vmem [resolvable:$true] %s15
      %21 = dma.hbm_to_vmem [thread:$0]  %s0, 8192, %s16, [#allocation3], 128, 128, 8
    $region5: #{tpu_custom_call.1} parent=1 // pred_fallthru
      _
    // Predicated region
    $region6: #{tpu_custom_call.1} parent=1 // pred_check
      _
    $region7: #{tpu_custom_call.1} parent=1 // pred_check_branch
      %23 = sbr.rel (0) target = $region9
    $region8: #{tpu_custom_call.1} parent=1 // pred_region
      %s25 = ssub.s32 64, 64
      %26 = vsyncadd [#allocation6], %s25
      %s28 = sshll.u32 [#allocation5], 4
      %s29 = int_to_ptr.vmem [resolvable:$true] %s28
      %31 = dma.hbm_to_vmem [thread:$0]  %s1, 64, %s29, [#allocation6]
    $region9: #{tpu_custom_call.1} parent=1 // pred_fallthru
      _
    // Predicated region
    $region10: #{tpu_custom_call.1} parent=1 // pred_check
      _
    $region11: #{tpu_custom_call.1} parent=1 // pred_check_branch
      %33 = sbr.rel (0) target = $region13
    $region12: #{tpu_custom_call.1} parent=1 // pred_region
      %34 = dma.done [#allocation3], 8192
    $region13: #{tpu_custom_call.1} parent=1 // pred_fallthru
      _
    // Predicated region
    $region14: #{tpu_custom_call.1} parent=1 // pred_check
      _
    $region15: #{tpu_custom_call.1} parent=1 // pred_check_branch
      %36 = sbr.rel (0) target = $region17
    $region16: #{tpu_custom_call.1} parent=1 // pred_region
      %37 = dma.done [#allocation6], 64
    $region17: #{tpu_custom_call.1} parent=1 // pred_fallthru
      _
    %v38 = vld [vmem:[#allocation5] sm:$0x1]
    %v39 = vld [vmem:[#allocation5 + $0x1] sm:$0x1]
    %v40 = vld [vmem:[#allocation5 + $0x2] sm:$0x1]
    %v41 = vld [vmem:[#allocation2] sm:$0xff]
    %v42 = vld [vmem:[#allocation2 + $0x8] sm:$0xff]
    %v43 = vld [vmem:[#allocation2 + $0x80] sm:$0xff]
    %v44 = vld [vmem:[#allocation2 + $0x88] sm:$0xff]
    %v45 = vld [vmem:[#allocation2 + $0x100] sm:$0xff]
    %v46 = vld [vmem:[#allocation2 + $0x108] sm:$0xff]
    %v47 = vld [vmem:[#allocation2 + $0x180] sm:$0xff]
    %v48 = vld [vmem:[#allocation2 + $0x188] sm:$0xff]
    %v49 = vmax.f32 %v41, 1e-06
    %v50 = vmax.f32 %v42, 1e-06
    %v51 = vmax.f32 %v43, 1e-06
    %v52 = vmax.f32 %v44, 1e-06
    %v53 = vmax.f32 %v45, 1e-06
    %v54 = vmax.f32 %v46, 1e-06
    %v55 = vmax.f32 %v47, 1e-06
    %v56 = vmax.f32 %v48, 1e-06
    %v57 = vlaneseq
    %v58 = vshrl.u32 %v57, 7
    %v59 = vsub.s32 0, %v58
    %v60 = vrot.slane %v38, %v59
    %v61 = vpow.f32 %v49, %v60
    %v62 = vpow.f32 %v50, %v60
    %v63 = vpow.f32 %v51, %v60
    %v64 = vpow.f32 %v52, %v60
    %v65 = vpow.f32 %v53, %v60
    %v66 = vpow.f32 %v54, %v60
    %v67 = vpow.f32 %v55, %v60
    %v68 = vpow.f32 %v56, %v60
    %v69 = vadd.f32 %v61, 0.0
    %v70 = vadd.f32 %v62, 0.0
    %v71 = vadd.f32 %v63, 0.0
    %v72 = vadd.f32 %v64, 0.0
    %v73 = vadd.f32 %v65, 0.0
    %v74 = vadd.f32 %v66, 0.0
    %v75 = vadd.f32 %v67, 0.0
    %v76 = vadd.f32 %v68, 0.0
    %s77 = scalar_lea.vmem [#allocation2], 16
    %v78 = vld [vmem:[%s77] sm:$0xff]
    %v79 = vld [vmem:[%s77 + $0x8] sm:$0xff]
    %v80 = vld [vmem:[%s77 + $0x80] sm:$0xff]
    %v81 = vld [vmem:[%s77 + $0x88] sm:$0xff]
    %v82 = vld [vmem:[%s77 + $0x100] sm:$0xff]
    %v83 = vld [vmem:[%s77 + $0x108] sm:$0xff]
    %v84 = vld [vmem:[%s77 + $0x180] sm:$0xff]
    %v85 = vld [vmem:[%s77 + $0x188] sm:$0xff]
    %v86 = vmax.f32 %v78, 1e-06
    %v87 = vmax.f32 %v79, 1e-06
    %v88 = vmax.f32 %v80, 1e-06
    %v89 = vmax.f32 %v81, 1e-06
    %v90 = vmax.f32 %v82, 1e-06
    %v91 = vmax.f32 %v83, 1e-06
    %v92 = vmax.f32 %v84, 1e-06
    %v93 = vmax.f32 %v85, 1e-06
    %v94 = vpow.f32 %v86, %v60
    %v95 = vpow.f32 %v87, %v60
    %v96 = vpow.f32 %v88, %v60
    %v97 = vpow.f32 %v89, %v60
    %v98 = vpow.f32 %v90, %v60
    %v99 = vpow.f32 %v91, %v60
    %v100 = vpow.f32 %v92, %v60
    %v101 = vpow.f32 %v93, %v60
    %v102 = vadd.f32 %v69, %v94
    %v103 = vadd.f32 %v70, %v95
    %v104 = vadd.f32 %v71, %v96
    %v105 = vadd.f32 %v72, %v97
    %v106 = vadd.f32 %v73, %v98
    %v107 = vadd.f32 %v74, %v99
    %v108 = vadd.f32 %v75, %v100
    %v109 = vadd.f32 %v76, %v101
    %s110 = scalar_lea.vmem [#allocation2], 32
    %v111 = vld [vmem:[%s110] sm:$0xff]
    %v112 = vld [vmem:[%s110 + $0x8] sm:$0xff]
    %v113 = vld [vmem:[%s110 + $0x80] sm:$0xff]
    %v114 = vld [vmem:[%s110 + $0x88] sm:$0xff]
    %v115 = vld [vmem:[%s110 + $0x100] sm:$0xff]
    %v116 = vld [vmem:[%s110 + $0x108] sm:$0xff]
    %v117 = vld [vmem:[%s110 + $0x180] sm:$0xff]
    %v118 = vld [vmem:[%s110 + $0x188] sm:$0xff]
    %v119 = vmax.f32 %v111, 1e-06
    %v120 = vmax.f32 %v112, 1e-06
    %v121 = vmax.f32 %v113, 1e-06
    %v122 = vmax.f32 %v114, 1e-06
    %v123 = vmax.f32 %v115, 1e-06
    %v124 = vmax.f32 %v116, 1e-06
    %v125 = vmax.f32 %v117, 1e-06
    %v126 = vmax.f32 %v118, 1e-06
    %v127 = vpow.f32 %v119, %v60
    %v128 = vpow.f32 %v120, %v60
    %v129 = vpow.f32 %v121, %v60
    %v130 = vpow.f32 %v122, %v60
    %v131 = vpow.f32 %v123, %v60
    %v132 = vpow.f32 %v124, %v60
    %v133 = vpow.f32 %v125, %v60
    %v134 = vpow.f32 %v126, %v60
    %v135 = vadd.f32 %v102, %v127
    %v136 = vadd.f32 %v103, %v128
    %v137 = vadd.f32 %v104, %v129
    %v138 = vadd.f32 %v105, %v130
    %v139 = vadd.f32 %v106, %v131
    %v140 = vadd.f32 %v107, %v132
    %v141 = vadd.f32 %v108, %v133
    %v142 = vadd.f32 %v109, %v134
    %s143 = scalar_lea.vmem [#allocation2], 48
    %v144 = vld [vmem:[%s143] sm:$0xff]
    %v145 = vld [vmem:[%s143 + $0x8] sm:$0xff]
    %v146 = vld [vmem:[%s143 + $0x80] sm:$0xff]
    %v147 = vld [vmem:[%s143 + $0x88] sm:$0xff]
    %v148 = vld [vmem:[%s143 + $0x100] sm:$0xff]
    %v149 = vld [vmem:[%s143 + $0x108] sm:$0xff]
    %v150 = vld [vmem:[%s143 + $0x180] sm:$0xff]
    %v151 = vld [vmem:[%s143 + $0x188] sm:$0xff]
    %v152 = vmax.f32 %v144, 1e-06
    %v153 = vmax.f32 %v145, 1e-06
    %v154 = vmax.f32 %v146, 1e-06
    %v155 = vmax.f32 %v147, 1e-06
    %v156 = vmax.f32 %v148, 1e-06
    %v157 = vmax.f32 %v149, 1e-06
    %v158 = vmax.f32 %v150, 1e-06
    %v159 = vmax.f32 %v151, 1e-06
    %v160 = vpow.f32 %v152, %v60
    %v161 = vpow.f32 %v153, %v60
    %v162 = vpow.f32 %v154, %v60
    %v163 = vpow.f32 %v155, %v60
    %v164 = vpow.f32 %v156, %v60
    %v165 = vpow.f32 %v157, %v60
    %v166 = vpow.f32 %v158, %v60
    %v167 = vpow.f32 %v159, %v60
    %v168 = vadd.f32 %v135, %v160
    %v169 = vadd.f32 %v136, %v161
    %v170 = vadd.f32 %v137, %v162
    %v171 = vadd.f32 %v138, %v163
    %v172 = vadd.f32 %v139, %v164
    %v173 = vadd.f32 %v140, %v165
    %v174 = vadd.f32 %v141, %v166
    %v175 = vadd.f32 %v142, %v167
    %s176 = scalar_lea.vmem [#allocation2], 64
    %v177 = vld [vmem:[%s176] sm:$0xff]
    %v178 = vld [vmem:[%s176 + $0x8] sm:$0xff]
    %v179 = vld [vmem:[%s176 + $0x80] sm:$0xff]
    %v180 = vld [vmem:[%s176 + $0x88] sm:$0xff]
    %v181 = vld [vmem:[%s176 + $0x100] sm:$0xff]
    %v182 = vld [vmem:[%s176 + $0x108] sm:$0xff]
    %v183 = vld [vmem:[%s176 + $0x180] sm:$0xff]
    %v184 = vld [vmem:[%s176 + $0x188] sm:$0xff]
    %v185 = vmax.f32 %v177, 1e-06
    %v186 = vmax.f32 %v178, 1e-06
    %v187 = vmax.f32 %v179, 1e-06
    %v188 = vmax.f32 %v180, 1e-06
    %v189 = vmax.f32 %v181, 1e-06
    %v190 = vmax.f32 %v182, 1e-06
    %v191 = vmax.f32 %v183, 1e-06
    %v192 = vmax.f32 %v184, 1e-06
    %v193 = vpow.f32 %v185, %v60
    %v194 = vpow.f32 %v186, %v60
    %v195 = vpow.f32 %v187, %v60
    %v196 = vpow.f32 %v188, %v60
    %v197 = vpow.f32 %v189, %v60
    %v198 = vpow.f32 %v190, %v60
    %v199 = vpow.f32 %v191, %v60
    %v200 = vpow.f32 %v192, %v60
    %v201 = vadd.f32 %v168, %v193
    %v202 = vadd.f32 %v169, %v194
    %v203 = vadd.f32 %v170, %v195
    %v204 = vadd.f32 %v171, %v196
    %v205 = vadd.f32 %v172, %v197
    %v206 = vadd.f32 %v173, %v198
    %v207 = vadd.f32 %v174, %v199
    %v208 = vadd.f32 %v175, %v200
    %s209 = scalar_lea.vmem [#allocation2], 80
    %v210 = vld [vmem:[%s209] sm:$0xff]
    %v211 = vld [vmem:[%s209 + $0x8] sm:$0xff]
    %v212 = vld [vmem:[%s209 + $0x80] sm:$0xff]
    %v213 = vld [vmem:[%s209 + $0x88] sm:$0xff]
    %v214 = vld [vmem:[%s209 + $0x100] sm:$0xff]
    %v215 = vld [vmem:[%s209 + $0x108] sm:$0xff]
    %v216 = vld [vmem:[%s209 + $0x180] sm:$0xff]
    %v217 = vld [vmem:[%s209 + $0x188] sm:$0xff]
    %v218 = vmax.f32 %v210, 1e-06
    %v219 = vmax.f32 %v211, 1e-06
    %v220 = vmax.f32 %v212, 1e-06
    %v221 = vmax.f32 %v213, 1e-06
    %v222 = vmax.f32 %v214, 1e-06
    %v223 = vmax.f32 %v215, 1e-06
    %v224 = vmax.f32 %v216, 1e-06
    %v225 = vmax.f32 %v217, 1e-06
    %v226 = vpow.f32 %v218, %v60
    %v227 = vpow.f32 %v219, %v60
    %v228 = vpow.f32 %v220, %v60
    %v229 = vpow.f32 %v221, %v60
    %v230 = vpow.f32 %v222, %v60
    %v231 = vpow.f32 %v223, %v60
    %v232 = vpow.f32 %v224, %v60
    %v233 = vpow.f32 %v225, %v60
    %v234 = vadd.f32 %v201, %v226
    %v235 = vadd.f32 %v202, %v227
    %v236 = vadd.f32 %v203, %v228
    %v237 = vadd.f32 %v204, %v229
    %v238 = vadd.f32 %v205, %v230
    %v239 = vadd.f32 %v206, %v231
    %v240 = vadd.f32 %v207, %v232
    %v241 = vadd.f32 %v208, %v233
    %s242 = scalar_lea.vmem [#allocation2], 96
    %v243 = vld [vmem:[%s242] sm:$0xff]
    %v244 = vld [vmem:[%s242 + $0x8] sm:$0xff]
    %v245 = vld [vmem:[%s242 + $0x80] sm:$0xff]
    %v246 = vld [vmem:[%s242 + $0x88] sm:$0xff]
    %v247 = vld [vmem:[%s242 + $0x100] sm:$0xff]
    %v248 = vld [vmem:[%s242 + $0x108] sm:$0xff]
    %v249 = vld [vmem:[%s242 + $0x180] sm:$0xff]
    %v250 = vld [vmem:[%s242 + $0x188] sm:$0xff]
    %v251 = vmax.f32 %v243, 1e-06
    %v252 = vmax.f32 %v244, 1e-06
    %v253 = vmax.f32 %v245, 1e-06
    %v254 = vmax.f32 %v246, 1e-06
    %v255 = vmax.f32 %v247, 1e-06
    %v256 = vmax.f32 %v248, 1e-06
    %v257 = vmax.f32 %v249, 1e-06
    %v258 = vmax.f32 %v250, 1e-06
    %v259 = vpow.f32 %v251, %v60
    %v260 = vpow.f32 %v252, %v60
    %v261 = vpow.f32 %v253, %v60
    %v262 = vpow.f32 %v254, %v60
    %v263 = vpow.f32 %v255, %v60
    %v264 = vpow.f32 %v256, %v60
    %v265 = vpow.f32 %v257, %v60
    %v266 = vpow.f32 %v258, %v60
    %v267 = vadd.f32 %v234, %v259
    %v268 = vadd.f32 %v235, %v260
    %v269 = vadd.f32 %v236, %v261
    %v270 = vadd.f32 %v237, %v262
    %v271 = vadd.f32 %v238, %v263
    %v272 = vadd.f32 %v239, %v264
    %v273 = vadd.f32 %v240, %v265
    %v274 = vadd.f32 %v241, %v266
    %s275 = scalar_lea.vmem [#allocation2], 112
    %v276 = vld [vmem:[%s275] sm:$0xff]
    %v277 = vld [vmem:[%s275 + $0x8] sm:$0xff]
    %v278 = vld [vmem:[%s275 + $0x80] sm:$0xff]
    %v279 = vld [vmem:[%s275 + $0x88] sm:$0xff]
    %v280 = vld [vmem:[%s275 + $0x100] sm:$0xff]
    %v281 = vld [vmem:[%s275 + $0x108] sm:$0xff]
    %v282 = vld [vmem:[%s275 + $0x180] sm:$0xff]
    %v283 = vld [vmem:[%s275 + $0x188] sm:$0xff]
    %v284 = vmax.f32 %v276, 1e-06
    %v285 = vmax.f32 %v277, 1e-06
    %v286 = vmax.f32 %v278, 1e-06
    %v287 = vmax.f32 %v279, 1e-06
    %v288 = vmax.f32 %v280, 1e-06
    %v289 = vmax.f32 %v281, 1e-06
    %v290 = vmax.f32 %v282, 1e-06
    %v291 = vmax.f32 %v283, 1e-06
    %v292 = vpow.f32 %v284, %v60
    %v293 = vpow.f32 %v285, %v60
    %v294 = vpow.f32 %v286, %v60
    %v295 = vpow.f32 %v287, %v60
    %v296 = vpow.f32 %v288, %v60
    %v297 = vpow.f32 %v289, %v60
    %v298 = vpow.f32 %v290, %v60
    %v299 = vpow.f32 %v291, %v60
    %v300 = vadd.f32 %v267, %v292
    %v301 = vadd.f32 %v268, %v293
    %v302 = vadd.f32 %v269, %v294
    %v303 = vadd.f32 %v270, %v295
    %v304 = vadd.f32 %v271, %v296
    %v305 = vadd.f32 %v272, %v297
    %v306 = vadd.f32 %v273, %v298
    %v307 = vadd.f32 %v274, %v299
    %v308 = vrot.slane %v300, 4
    %v309 = vadd.f32 %v300, %v308
    %v310 = vrot.slane %v309, 2
    %v311 = vadd.f32 %v309, %v310
    %v312 = vrot.slane %v311, 1
    %v313 = vadd.f32 %v311, %v312
    %v314 = vrot.slane %v301, 4
    %v315 = vadd.f32 %v301, %v314
    %v316 = vrot.slane %v315, 2
    %v317 = vadd.f32 %v315, %v316
    %v318 = vrot.slane %v317, 1
    %v319 = vadd.f32 %v317, %v318
    %v320 = vrot.slane %v302, 4
    %v321 = vadd.f32 %v302, %v320
    %v322 = vrot.slane %v321, 2
    %v323 = vadd.f32 %v321, %v322
    %v324 = vrot.slane %v323, 1
    %v325 = vadd.f32 %v323, %v324
    %v326 = vrot.slane %v303, 4
    %v327 = vadd.f32 %v303, %v326
    %v328 = vrot.slane %v327, 2
    %v329 = vadd.f32 %v327, %v328
    %v330 = vrot.slane %v329, 1
    %v331 = vadd.f32 %v329, %v330
    %v332 = vrot.slane %v304, 4
    %v333 = vadd.f32 %v304, %v332
    %v334 = vrot.slane %v333, 2
    %v335 = vadd.f32 %v333, %v334
    %v336 = vrot.slane %v335, 1
    %v337 = vadd.f32 %v335, %v336
    %v338 = vrot.slane %v305, 4
    %v339 = vadd.f32 %v305, %v338
    %v340 = vrot.slane %v339, 2
    %v341 = vadd.f32 %v339, %v340
    %v342 = vrot.slane %v341, 1
    %v343 = vadd.f32 %v341, %v342
    %v344 = vrot.slane %v306, 4
    %v345 = vadd.f32 %v306, %v344
    %v346 = vrot.slane %v345, 2
    %v347 = vadd.f32 %v345, %v346
    %v348 = vrot.slane %v347, 1
    %v349 = vadd.f32 %v347, %v348
    %v350 = vrot.slane %v307, 4
    %v351 = vadd.f32 %v307, %v350
    %v352 = vrot.slane %v351, 2
    %v353 = vadd.f32 %v351, %v352
    %v354 = vrot.slane %v353, 1
    %v355 = vadd.f32 %v353, %v354
    %v356 = vlaneseq
    %v357 = vshrl.u32 %v356, 7
    %v358 = vsub.s32 0, %v357
    %v359 = vrot.slane %v39, %v358
    %v360 = vpow.f32 %v313, %v359
    %v361 = vpow.f32 %v319, %v359
    %v362 = vpow.f32 %v325, %v359
    %v363 = vpow.f32 %v331, %v359
    %v364 = vpow.f32 %v337, %v359
    %v365 = vpow.f32 %v343, %v359
    %v366 = vpow.f32 %v349, %v359
    %v367 = vpow.f32 %v355, %v359
    %v368 = vlaneseq
    %v369 = vshrl.u32 %v368, 7
    %v370 = vsub.s32 0, %v369
    %v371 = vrot.slane %v40, %v370
    %v372 = vmul.f32 %v360, %v371
    %v373 = vmul.f32 %v361, %v371
    %v374 = vmul.f32 %v362, %v371
    %v375 = vmul.f32 %v363, %v371
    %v376 = vmul.f32 %v364, %v371
    %v377 = vmul.f32 %v365, %v371
    %v378 = vmul.f32 %v366, %v371
    %v379 = vmul.f32 %v367, %v371
    %v388 = vrot.slane %v373, 7
    %vm389 = vcmask 1041409
    %v390 = vsel %vm389, %v388, %v372
    %v391 = vrot.slane %v375, 7
    %v392 = vsel %vm389, %v391, %v374
    %v393 = vrot.slane %v377, 7
    %v394 = vsel %vm389, %v393, %v376
    %v395 = vrot.slane %v379, 7
    %v396 = vsel %vm389, %v395, %v378
    %401 = vst [vmem:[#allocation7] sm:$0x3] %v390
    %402 = vst [vmem:[#allocation7 + $0x2] sm:$0x3] %v392
    %403 = vst [vmem:[#allocation7 + $0x4] sm:$0x3] %v394
    %404 = vst [vmem:[#allocation7 + $0x6] sm:$0x3] %v396
    // Predicated region
    $region18: #{tpu_custom_call.1} parent=1 // pred_check
      _
    $region19: #{tpu_custom_call.1} parent=1 // pred_check_branch
      %406 = sbr.rel (0) target = $region21
    $region20: #{tpu_custom_call.1} parent=1 // pred_region
      %s408 = ssub.s32 128, 128
      %409 = vsyncadd [#allocation4], %s408
      %s410 = sshll.u32 [#allocation7], 4
      %s411 = int_to_ptr.vmem [resolvable:$true] %s410
      %416 = dma.vmem_to_hbm [thread:$0]  %s411, 128, %s2, [#allocation4], 32, 32, 2
    $region21: #{tpu_custom_call.1} parent=1 // pred_fallthru
      _
    // Predicated region
    $region22: #{tpu_custom_call.1} parent=1 // pred_check
      _
    $region23: #{tpu_custom_call.1} parent=1 // pred_check_branch
      %418 = sbr.rel (0) target = $region25
    $region24: #{tpu_custom_call.1} parent=1 // pred_region
      %419 = dma.done [#allocation4], 128
    $region25: #{tpu_custom_call.1} parent=1 // pred_fallthru
      _
    %420 = vsyncpa [#allocation3], 1
    %421 = vsyncpa [#allocation6], 1
    %422 = vsyncpa [#allocation4], 1

</llo_original>
